<compile_context>
chip_gen: v7x
topology: tpu7x:2x2x1
jax: 0.10.0
libtpu: 0.0.40
codegen_flags: <defaults>
</compile_context>

<pallas_src>
import functools
import math

import jax
import jax.numpy as jnp
from jax.experimental import pallas as pl
from jax.experimental.pallas import tpu as pltpu


def _round_up(x, m):
    return ((x + m - 1) // m) * m


# ----------------------------------------------------------------------------
# Kernel
# ----------------------------------------------------------------------------
def disproj_kernel(dis_ref, w_in_ref, b_in_ref, w_hid_ref, b_hid_ref,
                   out_ref, *, n_layers):
    # dis_ref  : (TI, 1)    f32  -- one scalar distance per row
    # w_in_ref : (1, H) f32      b_in_ref : (1, H) f32
    # w_hid_ref: (L, H, H) bf16  b_hid_ref: (L, 1, H) f32
    d = dis_ref[...]                                     # (TI, 1) f32

    # linear_in: out[m, h] = dis[m] * W_in[0, h] + b_in[h]  (outer product,
    # done on the VPU -- no K=1 MXU matmul).
    mid = d * w_in_ref[...] + b_in_ref[...]              # (TI, H) f32

    # hidden layers: mid = SiLU(mid @ W_l + b_l)
    for l in range(n_layers):                            # static, unrolled
        h = jnp.dot(mid.astype(jnp.bfloat16), w_hid_ref[l],
                    preferred_element_type=jnp.float32) + b_hid_ref[l]
        # SiLU(x) = x * sigmoid(x) = 0.5 * x * (1 + tanh(0.5 * x))
        # -> single EUP transcendental per element; rest stays on the VALU.
        mid = 0.5 * h * (1.0 + jnp.tanh(0.5 * h))

    out_ref[...] = mid.astype(out_ref.dtype)


# ----------------------------------------------------------------------------
# Wrapper
# ----------------------------------------------------------------------------
def dis_proj(dis, w_in, b_in, w_hid, b_hid, *, tile=1024,
             out_dtype=jnp.float32):
    """dis: arbitrary-shape float array. Returns dis.shape + (H,)."""
    orig_shape = dis.shape
    H = w_in.shape[1]
    L = w_hid.shape[0]

    flat = dis.reshape(-1).astype(jnp.float32)
    M = flat.shape[0]

    # Row tile: multiple of 8 (sublane constraint), large enough to amortise
    # per-step overhead, but clamped so the parallel grid keeps >= 2 steps
    # when M allows (so both v7x TensorCores get work for small M).
    half = _round_up(pl.cdiv(M, 2), 8)
    tile = max(8, _round_up(min(tile, half), 8))
    n_tiles = pl.cdiv(M, tile)          # ragged last block handled by Pallas

    d2 = flat.reshape(M, 1)
    w_hid_bf16 = w_hid.astype(jnp.bfloat16)   # bf16 MXU inputs, f32 accumulate

    cost = pl.CostEstimate(
        flops=2 * M * H * H * L + 2 * M * H,
        transcendentals=M * H * L,
        bytes_accessed=(4 * M                      # dis read
                        + jnp.dtype(out_dtype).itemsize * M * H  # output write
                        + 2 * L * H * H            # bf16 hidden weights
                        + 8 * H + 4 * L * H),      # in/out biases, w_in
    )

    out = pl.pallas_call(
        functools.partial(disproj_kernel, n_layers=L),
        out_shape=jax.ShapeDtypeStruct((M, H), out_dtype),
        grid=(n_tiles,),
        in_specs=[
            pl.BlockSpec((tile, 1), lambda i: (i, 0)),      # dis rows (tiled)
            pl.BlockSpec((1, H), lambda i: (0, 0)),         # w_in   (resident)
            pl.BlockSpec((1, H), lambda i: (0, 0)),         # b_in   (resident)
            pl.BlockSpec((L, H, H), lambda i: (0, 0, 0)),   # w_hid  (resident)
            pl.BlockSpec((L, 1, H), lambda i: (0, 0, 0)),   # b_hid  (resident)
        ],
        out_specs=pl.BlockSpec((tile, H), lambda i: (i, 0)),
        compiler_params=pltpu.CompilerParams(
            dimension_semantics=("parallel",)),             # megacore on v7x
        cost_estimate=cost,
    )(d2, w_in, b_in, w_hid_bf16, b_hid)

    return out.reshape(*orig_shape, H)


# ----------------------------------------------------------------------------
# Deterministic synthetic parameters (shapes follow the module __init__)
# ----------------------------------------------------------------------------
def init_params(key, hiddim, n_layers):
    k_in_w, k_in_b, k_hw, k_hb = jax.random.split(key, 4)
    w_in = jax.random.normal(k_in_w, (1, hiddim), jnp.float32)
    b_in = jax.random.normal(k_in_b, (1, hiddim), jnp.float32) * 0.05
    w_hid = (jax.random.normal(k_hw, (n_layers, hiddim, hiddim), jnp.float32)
             / math.sqrt(hiddim))
    b_hid = jax.random.normal(k_hb, (n_layers, 1, hiddim), jnp.float32) * 0.05
    return w_in, b_in, w_hid, b_hid


# ----------------------------------------------------------------------------
# Pure-JAX reference (mirrors the PyTorch forward exactly, f32 throughout)
# ----------------------------------------------------------------------------
def reference(dis, w_in, b_in, w_hid, b_hid):
    d = dis[..., None].astype(jnp.float32)          # unsqueeze(-1)
    mid = d * w_in[0] + b_in[0]                     # Linear(1, H)
    for l in range(w_hid.shape[0]):
        mid = jax.nn.silu(jnp.dot(mid, w_hid[l]) + b_hid[l, 0])
    return mid


# ----------------------------------------------------------------------------
if __name__ == "__main__":
    # config: disProj_hiddim = 128 (lane-dense), disProj_layers = 3.
    # dis shape (4, 100): 400 rows -> tile clamped to 200 -> 2 row-tiles
    # (so both v7x TensorCores are used even at this small size).
    hiddim, n_layers = 128, 3
    dis_shape = (4, 100)

    key = jax.random.PRNGKey(0)
    kd, kp = jax.random.split(key)
    dis = jax.random.normal(kd, dis_shape, jnp.float32)
    w_in, b_in, w_hid, b_hid = init_params(kp, hiddim, n_layers)

    out = dis_proj(dis, w_in, b_in, w_hid, b_hid)
    jax.block_until_ready(out)

    ref = reference(dis, w_in, b_in, w_hid, b_hid)
    assert out.shape == dis_shape + (hiddim,)
    # bf16 matmul inputs / f32 accumulate vs f32 reference -> small numeric
    # drift; 2e-2 tolerance (same as before) comfortably covers it.
    assert jnp.allclose(out, ref, atol=2e-2, rtol=2e-2), "disProj output mismatch"

    print("KERNEL_OK")
</pallas_src>

<mosaic_0001>
module attributes {stable_mosaic.version = 11 : i64} {
  func.func @disproj_kernel(%arg0: i32, %arg1: memref<200x1xf32, #tpu.memory_space<vmem>>, %arg2: memref<1x128xf32, #tpu.memory_space<vmem>>, %arg3: memref<1x128xf32, #tpu.memory_space<vmem>>, %arg4: memref<3x128x128xbf16, #tpu.memory_space<vmem>>, %arg5: memref<3x1x128xf32, #tpu.memory_space<vmem>>, %arg6: memref<200x128xf32, #tpu.memory_space<vmem>>) attributes {dimension_semantics = [#tpu.dimension_semantics<parallel>], iteration_bounds = array<i64: 2>, scalar_prefetch = 0 : i64, scratch_operands = 0 : i64, tpu.core_type = #tpu.core_type<tc>, window_params = [{transform_indices = @transform_0, window_bounds = array<i64: 200, 1>}, {pipeline_mode = #tpu.pipeline_mode<synchronous>, transform_indices = @transform_1, window_bounds = array<i64: 1, 128>}, {pipeline_mode = #tpu.pipeline_mode<synchronous>, transform_indices = @transform_2, window_bounds = array<i64: 1, 128>}, {pipeline_mode = #tpu.pipeline_mode<synchronous>, transform_indices = @transform_3, window_bounds = array<i64: 3, 128, 128>}, {pipeline_mode = #tpu.pipeline_mode<synchronous>, transform_indices = @transform_4, window_bounds = array<i64: 3, 1, 128>}, {transform_indices = @transform_5, window_bounds = array<i64: 200, 128>}]} {
    %c0 = arith.constant 0 : index
    %c0_0 = arith.constant 0 : index
    %0 = vector.load %arg1[%c0, %c0_0] : memref<200x1xf32, #tpu.memory_space<vmem>>, vector<200x1xf32>
    %c0_1 = arith.constant 0 : index
    %c0_2 = arith.constant 0 : index
    %1 = vector.load %arg2[%c0_1, %c0_2] : memref<1x128xf32, #tpu.memory_space<vmem>>, vector<1x128xf32>
    %2 = vector.broadcast %0 : vector<200x1xf32> to vector<200x128xf32>
    %3 = vector.broadcast %1 : vector<1x128xf32> to vector<200x128xf32>
    %4 = arith.mulf %2, %3 : vector<200x128xf32>
    %c0_3 = arith.constant 0 : index
    %c0_4 = arith.constant 0 : index
    %5 = vector.load %arg3[%c0_3, %c0_4] : memref<1x128xf32, #tpu.memory_space<vmem>>, vector<1x128xf32>
    %6 = vector.broadcast %5 : vector<1x128xf32> to vector<200x128xf32>
    %7 = arith.addf %4, %6 : vector<200x128xf32>
    %8 = arith.truncf %7 : vector<200x128xf32> to vector<200x128xbf16>
    %c0_5 = arith.constant 0 : index
    %c0_6 = arith.constant 0 : index
    %c0_7 = arith.constant 0 : index
    %9 = vector.load %arg4[%c0_5, %c0_6, %c0_7] : memref<3x128x128xbf16, #tpu.memory_space<vmem>>, vector<1x128x128xbf16>
    %10 = vector.shape_cast %9 : vector<1x128x128xbf16> to vector<128x128xbf16>
    %cst = arith.constant dense<0.000000e+00> : vector<200x128xf32>
    %11 = tpu.matmul %8, %10, %cst {dimension_numbers = #tpu.dot_dimension_numbers<[1], [0], [0], [1], [0, 0, 1, 1], [], []>} : vector<200x128xbf16>, vector<128x128xbf16>, vector<200x128xf32> -> vector<200x128xf32>
    %c0_8 = arith.constant 0 : index
    %c0_9 = arith.constant 0 : index
    %c0_10 = arith.constant 0 : index
    %12 = vector.load %arg5[%c0_8, %c0_9, %c0_10] : memref<3x1x128xf32, #tpu.memory_space<vmem>>, vector<1x1x128xf32>
    %13 = vector.shape_cast %12 : vector<1x1x128xf32> to vector<1x128xf32>
    %14 = vector.broadcast %13 : vector<1x128xf32> to vector<200x128xf32>
    %15 = arith.addf %11, %14 : vector<200x128xf32>
    %cst_11 = arith.constant 5.000000e-01 : f32
    %16 = vector.broadcast %cst_11 : f32 to vector<200x128xf32>
    %17 = arith.mulf %16, %15 : vector<200x128xf32>
    %cst_12 = arith.constant 5.000000e-01 : f32
    %18 = vector.broadcast %cst_12 : f32 to vector<200x128xf32>
    %19 = arith.mulf %18, %15 : vector<200x128xf32>
    %20 = math.tanh %19 : vector<200x128xf32>
    %cst_13 = arith.constant 1.000000e+00 : f32
    %21 = vector.broadcast %cst_13 : f32 to vector<200x128xf32>
    %22 = arith.addf %21, %20 : vector<200x128xf32>
    %23 = arith.mulf %17, %22 : vector<200x128xf32>
    %24 = arith.truncf %23 : vector<200x128xf32> to vector<200x128xbf16>
    %c1 = arith.constant 1 : index
    %c0_14 = arith.constant 0 : index
    %c0_15 = arith.constant 0 : index
    %25 = vector.load %arg4[%c1, %c0_14, %c0_15] : memref<3x128x128xbf16, #tpu.memory_space<vmem>>, vector<1x128x128xbf16>
    %26 = vector.shape_cast %25 : vector<1x128x128xbf16> to vector<128x128xbf16>
    %cst_16 = arith.constant dense<0.000000e+00> : vector<200x128xf32>
    %27 = tpu.matmul %24, %26, %cst_16 {dimension_numbers = #tpu.dot_dimension_numbers<[1], [0], [0], [1], [0, 0, 1, 1], [], []>} : vector<200x128xbf16>, vector<128x128xbf16>, vector<200x128xf32> -> vector<200x128xf32>
    %c1_17 = arith.constant 1 : index
    %c0_18 = arith.constant 0 : index
    %c0_19 = arith.constant 0 : index
    %28 = vector.load %arg5[%c1_17, %c0_18, %c0_19] : memref<3x1x128xf32, #tpu.memory_space<vmem>>, vector<1x1x128xf32>
    %29 = vector.shape_cast %28 : vector<1x1x128xf32> to vector<1x128xf32>
    %30 = vector.broadcast %29 : vector<1x128xf32> to vector<200x128xf32>
    %31 = arith.addf %27, %30 : vector<200x128xf32>
    %cst_20 = arith.constant 5.000000e-01 : f32
    %32 = vector.broadcast %cst_20 : f32 to vector<200x128xf32>
    %33 = arith.mulf %32, %31 : vector<200x128xf32>
    %cst_21 = arith.constant 5.000000e-01 : f32
    %34 = vector.broadcast %cst_21 : f32 to vector<200x128xf32>
    %35 = arith.mulf %34, %31 : vector<200x128xf32>
    %36 = math.tanh %35 : vector<200x128xf32>
    %cst_22 = arith.constant 1.000000e+00 : f32
    %37 = vector.broadcast %cst_22 : f32 to vector<200x128xf32>
    %38 = arith.addf %37, %36 : vector<200x128xf32>
    %39 = arith.mulf %33, %38 : vector<200x128xf32>
    %40 = arith.truncf %39 : vector<200x128xf32> to vector<200x128xbf16>
    %c2 = arith.constant 2 : index
    %c0_23 = arith.constant 0 : index
    %c0_24 = arith.constant 0 : index
    %41 = vector.load %arg4[%c2, %c0_23, %c0_24] : memref<3x128x128xbf16, #tpu.memory_space<vmem>>, vector<1x128x128xbf16>
    %42 = vector.shape_cast %41 : vector<1x128x128xbf16> to vector<128x128xbf16>
    %cst_25 = arith.constant dense<0.000000e+00> : vector<200x128xf32>
    %43 = tpu.matmul %40, %42, %cst_25 {dimension_numbers = #tpu.dot_dimension_numbers<[1], [0], [0], [1], [0, 0, 1, 1], [], []>} : vector<200x128xbf16>, vector<128x128xbf16>, vector<200x128xf32> -> vector<200x128xf32>
    %c2_26 = arith.constant 2 : index
    %c0_27 = arith.constant 0 : index
    %c0_28 = arith.constant 0 : index
    %44 = vector.load %arg5[%c2_26, %c0_27, %c0_28] : memref<3x1x128xf32, #tpu.memory_space<vmem>>, vector<1x1x128xf32>
    %45 = vector.shape_cast %44 : vector<1x1x128xf32> to vector<1x128xf32>
    %46 = vector.broadcast %45 : vector<1x128xf32> to vector<200x128xf32>
    %47 = arith.addf %43, %46 : vector<200x128xf32>
    %cst_29 = arith.constant 5.000000e-01 : f32
    %48 = vector.broadcast %cst_29 : f32 to vector<200x128xf32>
    %49 = arith.mulf %48, %47 : vector<200x128xf32>
    %cst_30 = arith.constant 5.000000e-01 : f32
    %50 = vector.broadcast %cst_30 : f32 to vector<200x128xf32>
    %51 = arith.mulf %50, %47 : vector<200x128xf32>
    %52 = math.tanh %51 : vector<200x128xf32>
    %cst_31 = arith.constant 1.000000e+00 : f32
    %53 = vector.broadcast %cst_31 : f32 to vector<200x128xf32>
    %54 = arith.addf %53, %52 : vector<200x128xf32>
    %55 = arith.mulf %49, %54 : vector<200x128xf32>
    %c0_32 = arith.constant 0 : index
    %c0_33 = arith.constant 0 : index
    %56 = vector.load %arg6[%c0_32, %c0_33] : memref<200x128xf32, #tpu.memory_space<vmem>>, vector<200x128xf32>
    tpu.vector_store %arg6[%c0_32, %c0_33], %55 {strides = array<i32>} : memref<200x128xf32, #tpu.memory_space<vmem>>, vector<200x128xf32>,
    return
  }
  func.func @transform_0(%arg0: i32) -> (i32, i32) {
    %c0_i32 = arith.constant 0 : i32
    %c0_i32_0 = arith.constant 0 : i32
    return %arg0, %c0_i32 : i32, i32
  }
  func.func @transform_1(%arg0: i32) -> (i32, i32) {
    %c0_i32 = arith.constant 0 : i32
    %c0_i32_0 = arith.constant 0 : i32
    %c0_i32_1 = arith.constant 0 : i32
    return %c0_i32, %c0_i32_0 : i32, i32
  }
  func.func @transform_2(%arg0: i32) -> (i32, i32) {
    %c0_i32 = arith.constant 0 : i32
    %c0_i32_0 = arith.constant 0 : i32
    %c0_i32_1 = arith.constant 0 : i32
    return %c0_i32, %c0_i32_0 : i32, i32
  }
  func.func @transform_3(%arg0: i32) -> (i32, i32, i32) {
    %c0_i32 = arith.constant 0 : i32
    %c0_i32_0 = arith.constant 0 : i32
    %c0_i32_1 = arith.constant 0 : i32
    %c0_i32_2 = arith.constant 0 : i32
    return %c0_i32, %c0_i32_0, %c0_i32_1 : i32, i32, i32
  }
  func.func @transform_4(%arg0: i32) -> (i32, i32, i32) {
    %c0_i32 = arith.constant 0 : i32
    %c0_i32_0 = arith.constant 0 : i32
    %c0_i32_1 = arith.constant 0 : i32
    %c0_i32_2 = arith.constant 0 : i32
    return %c0_i32, %c0_i32_0, %c0_i32_1 : i32, i32, i32
  }
  func.func @transform_5(%arg0: i32) -> (i32, i32) {
    %c0_i32 = arith.constant 0 : i32
    %c0_i32_0 = arith.constant 0 : i32
    return %arg0, %c0_i32 : i32, i32
  }
}

</mosaic_0001>

<llo_original>
// kernel: tpu_custom_call.1
$region0: #{tpu_custom_call.1}
  #allocation0 [shape = 'u32[]', space=smem, size = 0x4, offset = 0x4, fixed_abs, tag = 'smem constant byte address 0x4 - core index']
  #allocation1 [shape = 'u32[144,128]{1,0:T(1,128)}', space=vmem, size = 0x12000, scoped, tag = 'internal scratch']
  %s0 = inlined_call_operand.vmem [shape: f32[400,1], index: 0, kind: input, shape index: {}]
  %s1 = inlined_call_operand.vmem [shape: f32[1,128], index: 1, kind: input, shape index: {}]
  %s2 = inlined_call_operand.vmem [shape: f32[1,128], index: 2, kind: input, shape index: {}]
  %s3 = inlined_call_operand.vmem [shape: bf16[3,128,128], index: 3, kind: input, shape index: {}]
  %s4 = inlined_call_operand.vmem [shape: f32[3,1,128], index: 4, kind: input, shape index: {}]
  %s5 = inlined_call_operand.hbm [shape: f32[400,128], index: 5, kind: output, shape index: {}]
  %s6 = sld [smem:[#allocation0]]
  $region53: #{tpu_custom_call.1} parent=0
    _
  %s8 = ssub.s32 1, %s6
  %s9 = scalar_select 0, %s8, %s6
  $region1: #{tpu_custom_call.1} parent=0
    #allocation2 [shape = 'u8[204800]{0}', space=vmem, size = 0x32000, scoped, tag = 'output window, operand 0']
    #allocation3 [shape = 's32[2]{0}', space=sflag, size = 0x8, scoped, tag = 'scoped memory for tpu_custom_call.1']
    %10 = vsyncpa [#allocation3], 0
    %s11 = scalar_lea.sflag [#allocation3], 1
    %12 = vsyncpa %s11, 0
    loop: start=0, step=1, limit=4
    $region2: #{tpu_custom_call.1} parent=1 // loop_pre_header
      _
    $region3: #{tpu_custom_call.1} parent=1 // loop_header
      %s14 = sphi 0, %s18
      %p15 = scmp.ge.s32.totalorder %s14, 4
      %s24 = sphi 0, %s26
      %s27 = sphi 0, %s24
      %s28 = sphi 0, %s27
      %s44 = sphi 0, %s28
      %s48 = sphi 0, %s48
      %s50 = sphi 0, %s48
      %s51 = sphi 0, %s50
      %s65 = sphi 0, %s51
      %s69 = sphi 0, %s69
      %s71 = sphi 0, %s69
      %s72 = sphi 0, %s71
      %s86 = sphi 0, %s72
      %s90 = sphi 0, %s90
      %s92 = sphi 0, %s90
      %s93 = sphi 0, %s92
      %s107 = sphi 0, %s93
      %s111 = sphi 0, %s111
      %s113 = sphi 0, %s111
      %s114 = sphi 0, %s113
      %s128 = sphi 0, %s114
      %s134 = sphi 0, %s136
      %s137 = sphi 0, %s134
      %s138 = sphi 0, %s137
      %s154 = sphi 0, %s138
    $region4: #{tpu_custom_call.1} parent=1 // loop_header_branch
      %17 = sbr.rel (%p15) target = $region8
    $region5: #{tpu_custom_call.1} parent=1 // loop_body
      %s19 = ssub.s32 %s14, 1
      %s20 = ssub.s32 %s14, 2
      %s21 = sadd.s32 %s14, 1
      %s22 = ssub.s32 %s14, %s21
      %p23 = scmp.eq.s32.totalorder %s22, 0
      %s25 = sadd.s32 %s24, 1
      %s26 = scalar_select %p23, %s24, %s25
      %p29 = pneg %p23
      %p30 = scmp.eq.s32.totalorder %s14, 1
      %p31 = por %p29, %p30
      %p32 = scmp.ne.s32.totalorder %s24, %s27
      %p33 = scmp.eq.s32.totalorder %s14, 0
      %p34 = por %p32, %p33
      %p35 = scmp.ne.s32.totalorder %s24, %s27
      %p36 = scmp.eq.s32.totalorder %s19, 1
      %p37 = por %p35, %p36
      %p38 = scmp.ne.s32.totalorder %s27, %s28
      %p39 = scmp.eq.s32.totalorder %s19, 0
      %p40 = por %p38, %p39
      %p41 = scmp.ne.s32.totalorder %s27, %s28
      %p42 = scmp.eq.s32.totalorder %s20, 1
      %p43 = por %p41, %p42
      %p45 = scmp.ne.s32.totalorder %s28, %s44
      %p46 = scmp.eq.s32.totalorder %s20, 0
      %p47 = por %p45, %p46
      %s49 = sadd.s32 %s48, 1
      %p52 = scmp.eq.s32.totalorder %s14, 1
      %p53 = scmp.ne.s32.totalorder %s48, %s50
      %p54 = scmp.eq.s32.totalorder %s14, 0
      %p55 = por %p53, %p54
      %p56 = scmp.ne.s32.totalorder %s48, %s50
      %p57 = scmp.eq.s32.totalorder %s19, 1
      %p58 = por %p56, %p57
      %p59 = scmp.ne.s32.totalorder %s50, %s51
      %p60 = scmp.eq.s32.totalorder %s19, 0
      %p61 = por %p59, %p60
      %p62 = scmp.ne.s32.totalorder %s50, %s51
      %p63 = scmp.eq.s32.totalorder %s20, 1
      %p64 = por %p62, %p63
      %p66 = scmp.ne.s32.totalorder %s51, %s65
      %p67 = scmp.eq.s32.totalorder %s20, 0
      %p68 = por %p66, %p67
      %s70 = sadd.s32 %s69, 1
      %p73 = scmp.eq.s32.totalorder %s14, 1
      %p74 = scmp.ne.s32.totalorder %s69, %s71
      %p75 = scmp.eq.s32.totalorder %s14, 0
      %p76 = por %p74, %p75
      %p77 = scmp.ne.s32.totalorder %s69, %s71
      %p78 = scmp.eq.s32.totalorder %s19, 1
      %p79 = por %p77, %p78
      %p80 = scmp.ne.s32.totalorder %s71, %s72
      %p81 = scmp.eq.s32.totalorder %s19, 0
      %p82 = por %p80, %p81
      %p83 = scmp.ne.s32.totalorder %s71, %s72
      %p84 = scmp.eq.s32.totalorder %s20, 1
      %p85 = por %p83, %p84
      %p87 = scmp.ne.s32.totalorder %s72, %s86
      %p88 = scmp.eq.s32.totalorder %s20, 0
      %p89 = por %p87, %p88
      %s91 = sadd.s32 %s90, 1
      %p94 = scmp.eq.s32.totalorder %s14, 1
      %p95 = scmp.ne.s32.totalorder %s90, %s92
      %p96 = scmp.eq.s32.totalorder %s14, 0
      %p97 = por %p95, %p96
      %p98 = scmp.ne.s32.totalorder %s90, %s92
      %p99 = scmp.eq.s32.totalorder %s19, 1
      %p100 = por %p98, %p99
      %p101 = scmp.ne.s32.totalorder %s92, %s93
      %p102 = scmp.eq.s32.totalorder %s19, 0
      %p103 = por %p101, %p102
      %p104 = scmp.ne.s32.totalorder %s92, %s93
      %p105 = scmp.eq.s32.totalorder %s20, 1
      %p106 = por %p104, %p105
      %p108 = scmp.ne.s32.totalorder %s93, %s107
      %p109 = scmp.eq.s32.totalorder %s20, 0
      %p110 = por %p108, %p109
      %s112 = sadd.s32 %s111, 1
      %p115 = scmp.eq.s32.totalorder %s14, 1
      %p116 = scmp.ne.s32.totalorder %s111, %s113
      %p117 = scmp.eq.s32.totalorder %s14, 0
      %p118 = por %p116, %p117
      %p119 = scmp.ne.s32.totalorder %s111, %s113
      %p120 = scmp.eq.s32.totalorder %s19, 1
      %p121 = por %p119, %p120
      %p122 = scmp.ne.s32.totalorder %s113, %s114
      %p123 = scmp.eq.s32.totalorder %s19, 0
      %p124 = por %p122, %p123
      %p125 = scmp.ne.s32.totalorder %s113, %s114
      %p126 = scmp.eq.s32.totalorder %s20, 1
      %p127 = por %p125, %p126
      %p129 = scmp.ne.s32.totalorder %s114, %s128
      %p130 = scmp.eq.s32.totalorder %s20, 0
      %p131 = por %p129, %p130
      %s132 = ssub.s32 %s14, %s21
      %p133 = scmp.eq.s32.totalorder %s132, 0
      %s135 = sadd.s32 %s134, 1
      %s136 = scalar_select %p133, %s134, %s135
      %p139 = pneg %p133
      %p140 = scmp.eq.s32.totalorder %s14, 1
      %p141 = por %p139, %p140
      %p142 = scmp.ne.s32.totalorder %s134, %s137
      %p143 = scmp.eq.s32.totalorder %s14, 0
      %p144 = por %p142, %p143
      %p145 = scmp.ne.s32.totalorder %s134, %s137
      %p146 = scmp.eq.s32.totalorder %s19, 1
      %p147 = por %p145, %p146
      %p148 = scmp.ne.s32.totalorder %s137, %s138
      %p149 = scmp.eq.s32.totalorder %s19, 0
      %p150 = por %p148, %p149
      %p151 = scmp.ne.s32.totalorder %s137, %s138
      %p152 = scmp.eq.s32.totalorder %s20, 1
      %p153 = por %p151, %p152
      %p155 = scmp.ne.s32.totalorder %s138, %s154
      %p156 = scmp.eq.s32.totalorder %s20, 0
      %p157 = por %p155, %p156
      %p158 = scmp.le.s32.totalorder 1, %s14
      %p159 = scmp.lt.s32.totalorder %s14, 3
      %p160 = pnand %p158, %p159
      %p161 = pneg %p160
      // Predicated region
      $region9: #{tpu_custom_call.1} parent=5 // pred_check
        _
      $region10: #{tpu_custom_call.1} parent=5 // pred_check_branch
        %163 = sbr.rel (%p160) target = $region12
      $region11: #{tpu_custom_call.1} parent=5 // pred_region
        %s164 = ssub.s32 %s14, 1
        // Predicated region
        $region13: #{tpu_custom_call.1} parent=11 // pred_check
          %p165 = pneg %p61
        $region14: #{tpu_custom_call.1} parent=11 // pred_check_branch
          %167 = sbr.rel (%p165) target = $region16
        $region15: #{tpu_custom_call.1} parent=11 // pred_region
          _
        $region16: #{tpu_custom_call.1} parent=11 // pred_fallthru
          _
        // Predicated region
        $region17: #{tpu_custom_call.1} parent=11 // pred_check
          %p168 = pneg %p82
        $region18: #{tpu_custom_call.1} parent=11 // pred_check_branch
          %170 = sbr.rel (%p168) target = $region20
        $region19: #{tpu_custom_call.1} parent=11 // pred_region
          _
        $region20: #{tpu_custom_call.1} parent=11 // pred_fallthru
          _
        // Predicated region
        $region21: #{tpu_custom_call.1} parent=11 // pred_check
          %p171 = pneg %p103
        $region22: #{tpu_custom_call.1} parent=11 // pred_check_branch
          %173 = sbr.rel (%p171) target = $region24
        $region23: #{tpu_custom_call.1} parent=11 // pred_region
          _
        $region24: #{tpu_custom_call.1} parent=11 // pred_fallthru
          _
        // Predicated region
        $region25: #{tpu_custom_call.1} parent=11 // pred_check
          %p174 = pneg %p124
        $region26: #{tpu_custom_call.1} parent=11 // pred_check_branch
          %176 = sbr.rel (%p174) target = $region28
        $region27: #{tpu_custom_call.1} parent=11 // pred_region
          _
        $region28: #{tpu_custom_call.1} parent=11 // pred_fallthru
          _
      $region12: #{tpu_custom_call.1} parent=5 // pred_fallthru
        _
      %p177 = scmp.lt.s32.totalorder %s14, 2
      // Predicated region
      $region29: #{tpu_custom_call.1} parent=5 // pred_check
        %p178 = pneg %p177
      $region30: #{tpu_custom_call.1} parent=5 // pred_check_branch
        %180 = sbr.rel (%p178) target = $region32
      $region31: #{tpu_custom_call.1} parent=5 // pred_region
        // Predicated region
        $region33: #{tpu_custom_call.1} parent=31 // pred_check
          %p181 = pneg %p34
        $region34: #{tpu_custom_call.1} parent=31 // pred_check_branch
          %183 = sbr.rel (%p181) target = $region36
        $region35: #{tpu_custom_call.1} parent=31 // pred_region
          %s184 = smul.u32 25, %s14
          %p185 = scmp.lt.s32.totalorder %s184, 49
          %s186 = scalar_select %p185, %s184, 49
          %s187 = smul.addr %s186, 8
          %s188 = scalar_lea.vmem %s0, %s187
          %s189 = smul.u32 25, %s14
        $region36: #{tpu_custom_call.1} parent=31 // pred_fallthru
          _
      $region32: #{tpu_custom_call.1} parent=5 // pred_fallthru
        _
      %p190 = scmp.le.s32.totalorder 1, %s14
      %p191 = scmp.lt.s32.totalorder %s14, 3
      %p192 = pnand %p190, %p191
      %p193 = pneg %p192
      // Predicated region
      $region37: #{tpu_custom_call.1} parent=5 // pred_check
        _
      $region38: #{tpu_custom_call.1} parent=5 // pred_check_branch
        %195 = sbr.rel (%p192) target = $region40
      $region39: #{tpu_custom_call.1} parent=5 // pred_region
        %s196 = ssub.s32 %s14, 1
        %s197 = smul.u32 25, %s19
        %p198 = scmp.lt.s32.totalorder %s197, 49
        %s199 = scalar_select %p198, %s197, 49
        %s200 = smul.addr %s199, 8
        %s201 = scalar_lea.vmem %s0, %s200
        %p202 = pneg %p40
        %p203 = pneg %p37
        %p204 = pneg %p61
        %p205 = pneg %p58
        %p206 = pneg %p82
        %p207 = pneg %p79
        %p208 = pneg %p103
        %p209 = pneg %p100
        %p210 = pneg %p124
        %p211 = pneg %p121
        %p212 = pneg %p150
        %p213 = pneg %p147
        %s214 = sand.u32 %s137, 1
        %s215 = scalar_lea.sflag [#allocation3], %s214
        %s216 = sand.u32 %s137, 1
        %s217 = smul.addr %s216, 200
        %s218 = scalar_lea.vmem [#allocation2], %s217
        %s219 = smul.u32 25, %s19
        %p220 = scmp.lt.s32.totalorder %s219, 49
        %s221 = scalar_select %p220, %s219, 49
        %s222 = smul.addr %s221, 8
        %s223 = scalar_lea.vmem %s0, %s222
        %s224 = smul.u32 25, %s19
        %s225 = smul.u32 25, %s19
        %v227 = vld [vmem:[%s223] sm:$0xff]
        %v228 = vld [vmem:[%s223 + $0x8] sm:$0xff]
        %v229 = vld [vmem:[%s223 + $0x10] sm:$0xff]
        %v230 = vld [vmem:[%s223 + $0x18] sm:$0xff]
        %v231 = vld [vmem:[%s223 + $0x20] sm:$0xff]
        %v232 = vld [vmem:[%s223 + $0x28] sm:$0xff]
        %v233 = vld [vmem:[%s223 + $0x30] sm:$0xff]
        %v234 = vld [vmem:[%s223 + $0x38] sm:$0xff]
        %v235 = vld [vmem:[%s223 + $0x40] sm:$0xff]
        %v236 = vld [vmem:[%s223 + $0x48] sm:$0xff]
        %v237 = vld [vmem:[%s223 + $0x50] sm:$0xff]
        %v238 = vld [vmem:[%s223 + $0x58] sm:$0xff]
        %v239 = vld [vmem:[%s223 + $0x60] sm:$0xff]
        %v240 = vld [vmem:[%s223 + $0x68] sm:$0xff]
        %v241 = vld [vmem:[%s223 + $0x70] sm:$0xff]
        %v242 = vld [vmem:[%s223 + $0x78] sm:$0xff]
        %v243 = vld [vmem:[%s223 + $0x80] sm:$0xff]
        %v244 = vld [vmem:[%s223 + $0x88] sm:$0xff]
        %v245 = vld [vmem:[%s223 + $0x90] sm:$0xff]
        %v246 = vld [vmem:[%s223 + $0x98] sm:$0xff]
        %v247 = vld [vmem:[%s223 + $0xa0] sm:$0xff]
        %v248 = vld [vmem:[%s223 + $0xa8] sm:$0xff]
        %v249 = vld [vmem:[%s223 + $0xb0] sm:$0xff]
        %v250 = vld [vmem:[%s223 + $0xb8] sm:$0xff]
        %v251 = vld [vmem:[%s223 + $0xc0] sm:$0xff]
        %v252 = vld [vmem:[%s1] sm:$0x1]
        %254 = vset.pattern.permute.xlu0 0
        %255 = vperm.xlu0 %254, %v227
        %v256 = vpop.permute.xlu0 %255
        %259 = vset.pattern.permute.xlu0 0
        %260 = vperm.xlu0 %259, %v228
        %v261 = vpop.permute.xlu0 %260
        %264 = vset.pattern.permute.xlu0 0
        %265 = vperm.xlu0 %264, %v229
        %v266 = vpop.permute.xlu0 %265
        %269 = vset.pattern.permute.xlu0 0
        %270 = vperm.xlu0 %269, %v230
        %v271 = vpop.permute.xlu0 %270
        %274 = vset.pattern.permute.xlu0 0
        %275 = vperm.xlu0 %274, %v231
        %v276 = vpop.permute.xlu0 %275
        %279 = vset.pattern.permute.xlu0 0
        %280 = vperm.xlu0 %279, %v232
        %v281 = vpop.permute.xlu0 %280
        %284 = vset.pattern.permute.xlu0 0
        %285 = vperm.xlu0 %284, %v233
        %v286 = vpop.permute.xlu0 %285
        %289 = vset.pattern.permute.xlu0 0
        %290 = vperm.xlu0 %289, %v234
        %v291 = vpop.permute.xlu0 %290
        %294 = vset.pattern.permute.xlu0 0
        %295 = vperm.xlu0 %294, %v235
        %v296 = vpop.permute.xlu0 %295
        %299 = vset.pattern.permute.xlu0 0
        %300 = vperm.xlu0 %299, %v236
        %v301 = vpop.permute.xlu0 %300
        %304 = vset.pattern.permute.xlu0 0
        %305 = vperm.xlu0 %304, %v237
        %v306 = vpop.permute.xlu0 %305
        %309 = vset.pattern.permute.xlu0 0
        %310 = vperm.xlu0 %309, %v238
        %v311 = vpop.permute.xlu0 %310
        %314 = vset.pattern.permute.xlu0 0
        %315 = vperm.xlu0 %314, %v239
        %v316 = vpop.permute.xlu0 %315
        %319 = vset.pattern.permute.xlu0 0
        %320 = vperm.xlu0 %319, %v240
        %v321 = vpop.permute.xlu0 %320
        %324 = vset.pattern.permute.xlu0 0
        %325 = vperm.xlu0 %324, %v241
        %v326 = vpop.permute.xlu0 %325
        %329 = vset.pattern.permute.xlu0 0
        %330 = vperm.xlu0 %329, %v242
        %v331 = vpop.permute.xlu0 %330
        %334 = vset.pattern.permute.xlu0 0
        %335 = vperm.xlu0 %334, %v243
        %v336 = vpop.permute.xlu0 %335
        %339 = vset.pattern.permute.xlu0 0
        %340 = vperm.xlu0 %339, %v244
        %v341 = vpop.permute.xlu0 %340
        %344 = vset.pattern.permute.xlu0 0
        %345 = vperm.xlu0 %344, %v245
        %v346 = vpop.permute.xlu0 %345
        %349 = vset.pattern.permute.xlu0 0
        %350 = vperm.xlu0 %349, %v246
        %v351 = vpop.permute.xlu0 %350
        %354 = vset.pattern.permute.xlu0 0
        %355 = vperm.xlu0 %354, %v247
        %v356 = vpop.permute.xlu0 %355
        %359 = vset.pattern.permute.xlu0 0
        %360 = vperm.xlu0 %359, %v248
        %v361 = vpop.permute.xlu0 %360
        %364 = vset.pattern.permute.xlu0 0
        %365 = vperm.xlu0 %364, %v249
        %v366 = vpop.permute.xlu0 %365
        %369 = vset.pattern.permute.xlu0 0
        %370 = vperm.xlu0 %369, %v250
        %v371 = vpop.permute.xlu0 %370
        %374 = vset.pattern.permute.xlu0 0
        %375 = vperm.xlu0 %374, %v251
        %v376 = vpop.permute.xlu0 %375
        %v379 = vlaneseq
        %v380 = vshrl.u32 %v379, 7
        %v381 = vsub.s32 0, %v380
        %v382 = vrot.slane %v252, %v381
        %v384 = vmul.f32 %v256, %v382
        %v385 = vmul.f32 %v261, %v382
        %v386 = vmul.f32 %v266, %v382
        %v387 = vmul.f32 %v271, %v382
        %v388 = vmul.f32 %v276, %v382
        %v389 = vmul.f32 %v281, %v382
        %v390 = vmul.f32 %v286, %v382
        %v391 = vmul.f32 %v291, %v382
        %v392 = vmul.f32 %v296, %v382
        %v393 = vmul.f32 %v301, %v382
        %v394 = vmul.f32 %v306, %v382
        %v395 = vmul.f32 %v311, %v382
        %v396 = vmul.f32 %v316, %v382
        %v397 = vmul.f32 %v321, %v382
        %v398 = vmul.f32 %v326, %v382
        %v399 = vmul.f32 %v331, %v382
        %v400 = vmul.f32 %v336, %v382
        %v401 = vmul.f32 %v341, %v382
        %v402 = vmul.f32 %v346, %v382
        %v403 = vmul.f32 %v351, %v382
        %v404 = vmul.f32 %v356, %v382
        %v405 = vmul.f32 %v361, %v382
        %v406 = vmul.f32 %v366, %v382
        %v407 = vmul.f32 %v371, %v382
        %v408 = vmul.f32 %v376, %v382
        %v409 = vld [vmem:[%s2] sm:$0x1]
        %v411 = vlaneseq
        %v412 = vshrl.u32 %v411, 7
        %v413 = vsub.s32 0, %v412
        %v414 = vrot.slane %v409, %v413
        %v416 = vadd.f32 %v384, %v414
        %v417 = vadd.f32 %v385, %v414
        %v418 = vadd.f32 %v386, %v414
        %v419 = vadd.f32 %v387, %v414
        %v420 = vadd.f32 %v388, %v414
        %v421 = vadd.f32 %v389, %v414
        %v422 = vadd.f32 %v390, %v414
        %v423 = vadd.f32 %v391, %v414
        %v424 = vadd.f32 %v392, %v414
        %v425 = vadd.f32 %v393, %v414
        %v426 = vadd.f32 %v394, %v414
        %v427 = vadd.f32 %v395, %v414
        %v428 = vadd.f32 %v396, %v414
        %v429 = vadd.f32 %v397, %v414
        %v430 = vadd.f32 %v398, %v414
        %v431 = vadd.f32 %v399, %v414
        %v432 = vadd.f32 %v400, %v414
        %v433 = vadd.f32 %v401, %v414
        %v434 = vadd.f32 %v402, %v414
        %v435 = vadd.f32 %v403, %v414
        %v436 = vadd.f32 %v404, %v414
        %v437 = vadd.f32 %v405, %v414
        %v438 = vadd.f32 %v406, %v414
        %v439 = vadd.f32 %v407, %v414
        %v440 = vadd.f32 %v408, %v414
        %v441 = vpack.c.bf16 %v417, %v416
        %v442 = vpack.c.bf16 %v419, %v418
        %v443 = vpack.c.bf16 %v421, %v420
        %v444 = vpack.c.bf16 %v423, %v422
        %v445 = vpack.c.bf16 %v425, %v424
        %v446 = vpack.c.bf16 %v427, %v426
        %v447 = vpack.c.bf16 %v429, %v428
        %v448 = vpack.c.bf16 %v431, %v430
        %v449 = vpack.c.bf16 %v433, %v432
        %v450 = vpack.c.bf16 %v435, %v434
        %v451 = vpack.c.bf16 %v437, %v436
        %v452 = vpack.c.bf16 %v439, %v438
        %v453 = vpack.c.bf16 %v440, %v440
        %v454 = vld [vmem:[%s3] sm:$0xf]
        %v455 = vld [vmem:[%s3 + $0x4] sm:$0xf]
        %v456 = vld [vmem:[%s3 + $0x8] sm:$0xf]
        %v457 = vld [vmem:[%s3 + $0xc] sm:$0xf]
        %v458 = vld [vmem:[%s3 + $0x10] sm:$0xf]
        %v459 = vld [vmem:[%s3 + $0x14] sm:$0xf]
        %v460 = vld [vmem:[%s3 + $0x18] sm:$0xf]
        %v461 = vld [vmem:[%s3 + $0x1c] sm:$0xf]
        %v462 = vld [vmem:[%s3 + $0x20] sm:$0xf]
        %v463 = vld [vmem:[%s3 + $0x24] sm:$0xf]
        %v464 = vld [vmem:[%s3 + $0x28] sm:$0xf]
        %v465 = vld [vmem:[%s3 + $0x2c] sm:$0xf]
        %v466 = vld [vmem:[%s3 + $0x30] sm:$0xf]
        %v467 = vld [vmem:[%s3 + $0x34] sm:$0xf]
        %v468 = vld [vmem:[%s3 + $0x38] sm:$0xf]
        %v469 = vld [vmem:[%s3 + $0x3c] sm:$0xf]
        %v470 = vld [vmem:[%s4] sm:$0x1]
        %v472 = vlaneseq
        %v473 = vshrl.u32 %v472, 7
        %v474 = vsub.s32 0, %v473
        %v475 = vrot.slane %v470, %v474
        %v493 = vunpack.c.l.b16 %v454
        %v494 = vunpack.c.l.b16 %v455
        %v495 = vunpack.c.l.b16 %v456
        %v496 = vunpack.c.l.b16 %v457
        %v497 = vunpack.c.l.b16 %v458
        %v498 = vunpack.c.l.b16 %v459
        %v499 = vunpack.c.l.b16 %v460
        %v500 = vunpack.c.l.b16 %v461
        %v501 = vunpack.c.l.b16 %v462
        %v502 = vunpack.c.l.b16 %v463
        %v503 = vunpack.c.l.b16 %v464
        %v504 = vunpack.c.l.b16 %v465
        %v505 = vunpack.c.l.b16 %v466
        %v506 = vunpack.c.l.b16 %v467
        %v507 = vunpack.c.l.b16 %v468
        %v508 = vunpack.c.l.b16 %v469
        %v509 = vpack.c.b16 %v494, %v493
        %v510 = vpack.c.b16 %v496, %v495
        %v511 = vpack.c.b16 %v498, %v497
        %v512 = vpack.c.b16 %v500, %v499
        %v513 = vpack.c.b16 %v502, %v501
        %v514 = vpack.c.b16 %v504, %v503
        %v515 = vpack.c.b16 %v506, %v505
        %v516 = vpack.c.b16 %v508, %v507
        %525 = vmatprep.subr.bf16.mxu0 0
        %526 = vmatpush1.bf16.msra.mxu0 %v509
        %527 = vmatprep.subr.bf16.mxu0 0
        %528 = vmatpush1.bf16.msra.mxu0 %v510
        %529 = vmatprep.subr.bf16.mxu0 0
        %530 = vmatpush1.bf16.msra.mxu0 %v511
        %531 = vmatprep.subr.bf16.mxu0 0
        %532 = vmatpush1.bf16.msra.mxu0 %v512
        %533 = vmatprep.subr.bf16.mxu0 0
        %534 = vmatpush1.bf16.msra.mxu0 %v513
        %535 = vmatprep.subr.bf16.mxu0 0
        %536 = vmatpush1.bf16.msra.mxu0 %v514
        %537 = vmatprep.subr.bf16.mxu0 0
        %538 = vmatpush1.bf16.msra.mxu0 %v515
        %539 = vmatprep.subr.bf16.mxu0 0
        %540 = vmatpush1.bf16.msra.mxu0 %v516
        %541 = vmatprep.subr.bf16.mxu0 0
        %542 = vmatpush1.bf16.msra.mxu0 0
        %543 = vmatprep.subr.bf16.mxu0 0
        %544 = vmatpush1.bf16.msra.mxu0 0
        %545 = vmatprep.subr.bf16.mxu0 0
        %546 = vmatpush1.bf16.msra.mxu0 0
        %547 = vmatprep.subr.bf16.mxu0 0
        %548 = vmatpush1.bf16.msra.mxu0 0
        %549 = vmatprep.subr.bf16.mxu0 0
        %550 = vmatpush1.bf16.msra.mxu0 0
        %551 = vmatprep.subr.bf16.mxu0 0
        %552 = vmatpush1.bf16.msra.mxu0 0
        %553 = vmatprep.subr.bf16.mxu0 0
        %554 = vmatpush1.bf16.msra.mxu0 0
        %555 = vmatprep.subr.bf16.mxu0 0
        %556 = vmatpush1.bf16.msra.mxu0 0
        %557 = vmatprep.mubr.bf16.mxu0 0
        %558 = vmatmul.mubr.bf16.gmra.mrb[0].mxu0 %v441
        %v559 = vpop.f32.mrb[0].mxu0
        %v560 = vadd.f32 %v475, %v559
        %v561 = vpop.f32.mrb[0].mxu0
        %v562 = vpop.f32.mrb[0].mxu0
        %v563 = vadd.f32 %v475, %v562
        %v564 = vpop.f32.mrb[0].mxu0
        %565 = vmatprep.mubr.bf16.mxu0 0
        %566 = vmatmul.mubr.bf16.gmra.mrb[0].mxu0 %v442
        %v567 = vpop.f32.mrb[0].mxu0
        %v568 = vadd.f32 %v475, %v567
        %v569 = vpop.f32.mrb[0].mxu0
        %v570 = vpop.f32.mrb[0].mxu0
        %v571 = vadd.f32 %v475, %v570
        %v572 = vpop.f32.mrb[0].mxu0
        %573 = vmatprep.mubr.bf16.mxu0 0
        %574 = vmatmul.mubr.bf16.gmra.mrb[0].mxu0 %v443
        %v575 = vpop.f32.mrb[0].mxu0
        %v576 = vadd.f32 %v475, %v575
        %v577 = vpop.f32.mrb[0].mxu0
        %v578 = vpop.f32.mrb[0].mxu0
        %v579 = vadd.f32 %v475, %v578
        %v580 = vpop.f32.mrb[0].mxu0
        %581 = vmatprep.mubr.bf16.mxu0 0
        %582 = vmatmul.mubr.bf16.gmra.mrb[0].mxu0 %v444
        %v583 = vpop.f32.mrb[0].mxu0
        %v584 = vadd.f32 %v475, %v583
        %v585 = vpop.f32.mrb[0].mxu0
        %v586 = vpop.f32.mrb[0].mxu0
        %v587 = vadd.f32 %v475, %v586
        %v588 = vpop.f32.mrb[0].mxu0
        %589 = vmatprep.mubr.bf16.mxu0 0
        %590 = vmatmul.mubr.bf16.gmra.mrb[0].mxu0 %v445
        %v591 = vpop.f32.mrb[0].mxu0
        %v592 = vadd.f32 %v475, %v591
        %v593 = vpop.f32.mrb[0].mxu0
        %v594 = vpop.f32.mrb[0].mxu0
        %v595 = vadd.f32 %v475, %v594
        %v596 = vpop.f32.mrb[0].mxu0
        %597 = vmatprep.mubr.bf16.mxu0 0
        %598 = vmatmul.mubr.bf16.gmra.mrb[0].mxu0 %v446
        %v599 = vpop.f32.mrb[0].mxu0
        %v600 = vadd.f32 %v475, %v599
        %v601 = vpop.f32.mrb[0].mxu0
        %v602 = vpop.f32.mrb[0].mxu0
        %v603 = vadd.f32 %v475, %v602
        %v604 = vpop.f32.mrb[0].mxu0
        %605 = vmatprep.mubr.bf16.mxu0 0
        %606 = vmatmul.mubr.bf16.gmra.mrb[0].mxu0 %v447
        %v607 = vpop.f32.mrb[0].mxu0
        %v608 = vadd.f32 %v475, %v607
        %v609 = vpop.f32.mrb[0].mxu0
        %v610 = vpop.f32.mrb[0].mxu0
        %v611 = vadd.f32 %v475, %v610
        %v612 = vpop.f32.mrb[0].mxu0
        %613 = vmatprep.mubr.bf16.mxu0 0
        %614 = vmatmul.mubr.bf16.gmra.mrb[0].mxu0 %v448
        %v615 = vpop.f32.mrb[0].mxu0
        %v616 = vadd.f32 %v475, %v615
        %v617 = vpop.f32.mrb[0].mxu0
        %v618 = vpop.f32.mrb[0].mxu0
        %v619 = vadd.f32 %v475, %v618
        %v620 = vpop.f32.mrb[0].mxu0
        %621 = vmatprep.mubr.bf16.mxu0 0
        %622 = vmatmul.mubr.bf16.gmra.mrb[0].mxu0 %v449
        %v623 = vpop.f32.mrb[0].mxu0
        %v624 = vadd.f32 %v475, %v623
        %v625 = vpop.f32.mrb[0].mxu0
        %v626 = vpop.f32.mrb[0].mxu0
        %v627 = vadd.f32 %v475, %v626
        %v628 = vpop.f32.mrb[0].mxu0
        %629 = vmatprep.mubr.bf16.mxu0 0
        %630 = vmatmul.mubr.bf16.gmra.mrb[0].mxu0 %v450
        %v631 = vpop.f32.mrb[0].mxu0
        %v632 = vadd.f32 %v475, %v631
        %v633 = vpop.f32.mrb[0].mxu0
        %v634 = vpop.f32.mrb[0].mxu0
        %v635 = vadd.f32 %v475, %v634
        %v636 = vpop.f32.mrb[0].mxu0
        %637 = vmatprep.mubr.bf16.mxu0 0
        %638 = vmatmul.mubr.bf16.gmra.mrb[0].mxu0 %v451
        %v639 = vpop.f32.mrb[0].mxu0
        %v640 = vadd.f32 %v475, %v639
        %v641 = vpop.f32.mrb[0].mxu0
        %v642 = vpop.f32.mrb[0].mxu0
        %v643 = vadd.f32 %v475, %v642
        %v644 = vpop.f32.mrb[0].mxu0
        %645 = vmatprep.mubr.bf16.mxu0 0
        %646 = vmatmul.mubr.bf16.gmra.mrb[0].mxu0 %v452
        %v647 = vpop.f32.mrb[0].mxu0
        %v648 = vadd.f32 %v475, %v647
        %v649 = vpop.f32.mrb[0].mxu0
        %v650 = vpop.f32.mrb[0].mxu0
        %v651 = vadd.f32 %v475, %v650
        %v652 = vpop.f32.mrb[0].mxu0
        %653 = vmatprep.mubr.bf16.mxu0 0
        %654 = vmatmul.mubr.bf16.gmra.mrb[0].mxu0 %v453
        %v655 = vpop.f32.mrb[0].mxu0
        %v656 = vadd.f32 %v475, %v655
        %v657 = vpop.f32.mrb[0].mxu0
        %v658 = vpop.f32.mrb[0].mxu0
        %v659 = vpop.f32.mrb[0].mxu0
        %660 = vdwg.mxu0
        %v661 = vmul.f32 %v560, 0.5
        %v662 = vmul.f32 %v563, 0.5
        %v663 = vmul.f32 %v568, 0.5
        %v664 = vmul.f32 %v571, 0.5
        %v665 = vmul.f32 %v576, 0.5
        %v666 = vmul.f32 %v579, 0.5
        %v667 = vmul.f32 %v584, 0.5
        %v668 = vmul.f32 %v587, 0.5
        %v669 = vmul.f32 %v592, 0.5
        %v670 = vmul.f32 %v595, 0.5
        %v671 = vmul.f32 %v600, 0.5
        %v672 = vmul.f32 %v603, 0.5
        %v673 = vmul.f32 %v608, 0.5
        %v674 = vmul.f32 %v611, 0.5
        %v675 = vmul.f32 %v616, 0.5
        %v676 = vmul.f32 %v619, 0.5
        %v677 = vmul.f32 %v624, 0.5
        %v678 = vmul.f32 %v627, 0.5
        %v679 = vmul.f32 %v632, 0.5
        %v680 = vmul.f32 %v635, 0.5
        %v681 = vmul.f32 %v640, 0.5
        %v682 = vmul.f32 %v643, 0.5
        %v683 = vmul.f32 %v648, 0.5
        %v684 = vmul.f32 %v651, 0.5
        %v685 = vmul.f32 %v656, 0.5
        %v686 = vtanh.pop %v661
        %v687 = vtanh.pop %v662
        %v688 = vtanh.pop %v663
        %v689 = vtanh.pop %v664
        %v690 = vtanh.pop %v665
        %v691 = vtanh.pop %v666
        %v692 = vtanh.pop %v667
        %v693 = vtanh.pop %v668
        %v694 = vtanh.pop %v669
        %v695 = vtanh.pop %v670
        %v696 = vtanh.pop %v671
        %v697 = vtanh.pop %v672
        %v698 = vtanh.pop %v673
        %v699 = vtanh.pop %v674
        %v700 = vtanh.pop %v675
        %v701 = vtanh.pop %v676
        %v702 = vtanh.pop %v677
        %v703 = vtanh.pop %v678
        %v704 = vtanh.pop %v679
        %v705 = vtanh.pop %v680
        %v706 = vtanh.pop %v681
        %v707 = vtanh.pop %v682
        %v708 = vtanh.pop %v683
        %v709 = vtanh.pop %v684
        %v710 = vtanh.pop %v685
        %v711 = vadd.f32 %v686, 1.0
        %v712 = vadd.f32 %v687, 1.0
        %v713 = vadd.f32 %v688, 1.0
        %v714 = vadd.f32 %v689, 1.0
        %v715 = vadd.f32 %v690, 1.0
        %v716 = vadd.f32 %v691, 1.0
        %v717 = vadd.f32 %v692, 1.0
        %v718 = vadd.f32 %v693, 1.0
        %v719 = vadd.f32 %v694, 1.0
        %v720 = vadd.f32 %v695, 1.0
        %v721 = vadd.f32 %v696, 1.0
        %v722 = vadd.f32 %v697, 1.0
        %v723 = vadd.f32 %v698, 1.0
        %v724 = vadd.f32 %v699, 1.0
        %v725 = vadd.f32 %v700, 1.0
        %v726 = vadd.f32 %v701, 1.0
        %v727 = vadd.f32 %v702, 1.0
        %v728 = vadd.f32 %v703, 1.0
        %v729 = vadd.f32 %v704, 1.0
        %v730 = vadd.f32 %v705, 1.0
        %v731 = vadd.f32 %v706, 1.0
        %v732 = vadd.f32 %v707, 1.0
        %v733 = vadd.f32 %v708, 1.0
        %v734 = vadd.f32 %v709, 1.0
        %v735 = vadd.f32 %v710, 1.0
        %v736 = vmul.f32 %v661, %v711
        %v737 = vmul.f32 %v662, %v712
        %v738 = vmul.f32 %v663, %v713
        %v739 = vmul.f32 %v664, %v714
        %v740 = vmul.f32 %v665, %v715
        %v741 = vmul.f32 %v666, %v716
        %v742 = vmul.f32 %v667, %v717
        %v743 = vmul.f32 %v668, %v718
        %v744 = vmul.f32 %v669, %v719
        %v745 = vmul.f32 %v670, %v720
        %v746 = vmul.f32 %v671, %v721
        %v747 = vmul.f32 %v672, %v722
        %v748 = vmul.f32 %v673, %v723
        %v749 = vmul.f32 %v674, %v724
        %v750 = vmul.f32 %v675, %v725
        %v751 = vmul.f32 %v676, %v726
        %v752 = vmul.f32 %v677, %v727
        %v753 = vmul.f32 %v678, %v728
        %v754 = vmul.f32 %v679, %v729
        %v755 = vmul.f32 %v680, %v730
        %v756 = vmul.f32 %v681, %v731
        %v757 = vmul.f32 %v682, %v732
        %v758 = vmul.f32 %v683, %v733
        %v759 = vmul.f32 %v684, %v734
        %v760 = vmul.f32 %v685, %v735
        %v761 = vpack.c.bf16 %v737, %v736
        %v762 = vpack.c.bf16 %v739, %v738
        %v763 = vpack.c.bf16 %v741, %v740
        %v764 = vpack.c.bf16 %v743, %v742
        %v765 = vpack.c.bf16 %v745, %v744
        %v766 = vpack.c.bf16 %v747, %v746
        %v767 = vpack.c.bf16 %v749, %v748
        %v768 = vpack.c.bf16 %v751, %v750
        %v769 = vpack.c.bf16 %v753, %v752
        %v770 = vpack.c.bf16 %v755, %v754
        %v771 = vpack.c.bf16 %v757, %v756
        %v772 = vpack.c.bf16 %v759, %v758
        %v773 = vpack.c.bf16 %v760, %v760
        %s774 = scalar_lea.vmem %s3, 64
        %v775 = vld [vmem:[%s774] sm:$0xf]
        %v776 = vld [vmem:[%s774 + $0x4] sm:$0xf]
        %v777 = vld [vmem:[%s774 + $0x8] sm:$0xf]
        %v778 = vld [vmem:[%s774 + $0xc] sm:$0xf]
        %v779 = vld [vmem:[%s774 + $0x10] sm:$0xf]
        %v780 = vld [vmem:[%s774 + $0x14] sm:$0xf]
        %v781 = vld [vmem:[%s774 + $0x18] sm:$0xf]
        %v782 = vld [vmem:[%s774 + $0x1c] sm:$0xf]
        %v783 = vld [vmem:[%s774 + $0x20] sm:$0xf]
        %v784 = vld [vmem:[%s774 + $0x24] sm:$0xf]
        %v785 = vld [vmem:[%s774 + $0x28] sm:$0xf]
        %v786 = vld [vmem:[%s774 + $0x2c] sm:$0xf]
        %v787 = vld [vmem:[%s774 + $0x30] sm:$0xf]
        %v788 = vld [vmem:[%s774 + $0x34] sm:$0xf]
        %v789 = vld [vmem:[%s774 + $0x38] sm:$0xf]
        %v790 = vld [vmem:[%s774 + $0x3c] sm:$0xf]
        %s791 = scalar_lea.vmem %s4, 1
        %v792 = vld [vmem:[%s791] sm:$0x1]
        %v794 = vlaneseq
        %v795 = vshrl.u32 %v794, 7
        %v796 = vsub.s32 0, %v795
        %v797 = vrot.slane %v792, %v796
        %v815 = vunpack.c.l.b16 %v775
        %v816 = vunpack.c.l.b16 %v776
        %v817 = vunpack.c.l.b16 %v777
        %v818 = vunpack.c.l.b16 %v778
        %v819 = vunpack.c.l.b16 %v779
        %v820 = vunpack.c.l.b16 %v780
        %v821 = vunpack.c.l.b16 %v781
        %v822 = vunpack.c.l.b16 %v782
        %v823 = vunpack.c.l.b16 %v783
        %v824 = vunpack.c.l.b16 %v784
        %v825 = vunpack.c.l.b16 %v785
        %v826 = vunpack.c.l.b16 %v786
        %v827 = vunpack.c.l.b16 %v787
        %v828 = vunpack.c.l.b16 %v788
        %v829 = vunpack.c.l.b16 %v789
        %v830 = vunpack.c.l.b16 %v790
        %v831 = vpack.c.b16 %v816, %v815
        %v832 = vpack.c.b16 %v818, %v817
        %v833 = vpack.c.b16 %v820, %v819
        %v834 = vpack.c.b16 %v822, %v821
        %v835 = vpack.c.b16 %v824, %v823
        %v836 = vpack.c.b16 %v826, %v825
        %v837 = vpack.c.b16 %v828, %v827
        %v838 = vpack.c.b16 %v830, %v829
        %847 = vmatprep.subr.bf16.mxu0 0
        %848 = vmatpush1.bf16.msra.mxu0 %v831
        %849 = vmatprep.subr.bf16.mxu0 0
        %850 = vmatpush1.bf16.msra.mxu0 %v832
        %851 = vmatprep.subr.bf16.mxu0 0
        %852 = vmatpush1.bf16.msra.mxu0 %v833
        %853 = vmatprep.subr.bf16.mxu0 0
        %854 = vmatpush1.bf16.msra.mxu0 %v834
        %855 = vmatprep.subr.bf16.mxu0 0
        %856 = vmatpush1.bf16.msra.mxu0 %v835
        %857 = vmatprep.subr.bf16.mxu0 0
        %858 = vmatpush1.bf16.msra.mxu0 %v836
        %859 = vmatprep.subr.bf16.mxu0 0
        %860 = vmatpush1.bf16.msra.mxu0 %v837
        %861 = vmatprep.subr.bf16.mxu0 0
        %862 = vmatpush1.bf16.msra.mxu0 %v838
        %863 = vmatprep.subr.bf16.mxu0 0
        %864 = vmatpush1.bf16.msra.mxu0 0
        %865 = vmatprep.subr.bf16.mxu0 0
        %866 = vmatpush1.bf16.msra.mxu0 0
        %867 = vmatprep.subr.bf16.mxu0 0
        %868 = vmatpush1.bf16.msra.mxu0 0
        %869 = vmatprep.subr.bf16.mxu0 0
        %870 = vmatpush1.bf16.msra.mxu0 0
        %871 = vmatprep.subr.bf16.mxu0 0
        %872 = vmatpush1.bf16.msra.mxu0 0
        %873 = vmatprep.subr.bf16.mxu0 0
        %874 = vmatpush1.bf16.msra.mxu0 0
        %875 = vmatprep.subr.bf16.mxu0 0
        %876 = vmatpush1.bf16.msra.mxu0 0
        %877 = vmatprep.subr.bf16.mxu0 0
        %878 = vmatpush1.bf16.msra.mxu0 0
        %879 = vmatprep.mubr.bf16.mxu0 0
        %880 = vmatmul.mubr.bf16.gmra.mrb[0].mxu0 %v761
        %v881 = vpop.f32.mrb[0].mxu0
        %v882 = vadd.f32 %v797, %v881
        %v883 = vpop.f32.mrb[0].mxu0
        %v884 = vpop.f32.mrb[0].mxu0
        %v885 = vadd.f32 %v797, %v884
        %v886 = vpop.f32.mrb[0].mxu0
        %887 = vmatprep.mubr.bf16.mxu0 0
        %888 = vmatmul.mubr.bf16.gmra.mrb[0].mxu0 %v762
        %v889 = vpop.f32.mrb[0].mxu0
        %v890 = vadd.f32 %v797, %v889
        %v891 = vpop.f32.mrb[0].mxu0
        %v892 = vpop.f32.mrb[0].mxu0
        %v893 = vadd.f32 %v797, %v892
        %v894 = vpop.f32.mrb[0].mxu0
        %895 = vmatprep.mubr.bf16.mxu0 0
        %896 = vmatmul.mubr.bf16.gmra.mrb[0].mxu0 %v763
        %v897 = vpop.f32.mrb[0].mxu0
        %v898 = vadd.f32 %v797, %v897
        %v899 = vpop.f32.mrb[0].mxu0
        %v900 = vpop.f32.mrb[0].mxu0
        %v901 = vadd.f32 %v797, %v900
        %v902 = vpop.f32.mrb[0].mxu0
        %903 = vmatprep.mubr.bf16.mxu0 0
        %904 = vmatmul.mubr.bf16.gmra.mrb[0].mxu0 %v764
        %v905 = vpop.f32.mrb[0].mxu0
        %v906 = vadd.f32 %v797, %v905
        %v907 = vpop.f32.mrb[0].mxu0
        %v908 = vpop.f32.mrb[0].mxu0
        %v909 = vadd.f32 %v797, %v908
        %v910 = vpop.f32.mrb[0].mxu0
        %911 = vmatprep.mubr.bf16.mxu0 0
        %912 = vmatmul.mubr.bf16.gmra.mrb[0].mxu0 %v765
        %v913 = vpop.f32.mrb[0].mxu0
        %v914 = vadd.f32 %v797, %v913
        %v915 = vpop.f32.mrb[0].mxu0
        %v916 = vpop.f32.mrb[0].mxu0
        %v917 = vadd.f32 %v797, %v916
        %v918 = vpop.f32.mrb[0].mxu0
        %919 = vmatprep.mubr.bf16.mxu0 0
        %920 = vmatmul.mubr.bf16.gmra.mrb[0].mxu0 %v766
        %v921 = vpop.f32.mrb[0].mxu0
        %v922 = vadd.f32 %v797, %v921
        %v923 = vpop.f32.mrb[0].mxu0
        %v924 = vpop.f32.mrb[0].mxu0
        %v925 = vadd.f32 %v797, %v924
        %v926 = vpop.f32.mrb[0].mxu0
        %927 = vmatprep.mubr.bf16.mxu0 0
        %928 = vmatmul.mubr.bf16.gmra.mrb[0].mxu0 %v767
        %v929 = vpop.f32.mrb[0].mxu0
        %v930 = vadd.f32 %v797, %v929
        %v931 = vpop.f32.mrb[0].mxu0
        %v932 = vpop.f32.mrb[0].mxu0
        %v933 = vadd.f32 %v797, %v932
        %v934 = vpop.f32.mrb[0].mxu0
        %935 = vmatprep.mubr.bf16.mxu0 0
        %936 = vmatmul.mubr.bf16.gmra.mrb[0].mxu0 %v768
        %v937 = vpop.f32.mrb[0].mxu0
        %v938 = vadd.f32 %v797, %v937
        %v939 = vpop.f32.mrb[0].mxu0
        %v940 = vpop.f32.mrb[0].mxu0
        %v941 = vadd.f32 %v797, %v940
        %v942 = vpop.f32.mrb[0].mxu0
        %943 = vmatprep.mubr.bf16.mxu0 0
        %944 = vmatmul.mubr.bf16.gmra.mrb[0].mxu0 %v769
        %v945 = vpop.f32.mrb[0].mxu0
        %v946 = vadd.f32 %v797, %v945
        %v947 = vpop.f32.mrb[0].mxu0
        %v948 = vpop.f32.mrb[0].mxu0
        %v949 = vadd.f32 %v797, %v948
        %v950 = vpop.f32.mrb[0].mxu0
        %951 = vmatprep.mubr.bf16.mxu0 0
        %952 = vmatmul.mubr.bf16.gmra.mrb[0].mxu0 %v770
        %v953 = vpop.f32.mrb[0].mxu0
        %v954 = vadd.f32 %v797, %v953
        %v955 = vpop.f32.mrb[0].mxu0
        %v956 = vpop.f32.mrb[0].mxu0
        %v957 = vadd.f32 %v797, %v956
        %v958 = vpop.f32.mrb[0].mxu0
        %959 = vmatprep.mubr.bf16.mxu0 0
        %960 = vmatmul.mubr.bf16.gmra.mrb[0].mxu0 %v771
        %v961 = vpop.f32.mrb[0].mxu0
        %v962 = vadd.f32 %v797, %v961
        %v963 = vpop.f32.mrb[0].mxu0
        %v964 = vpop.f32.mrb[0].mxu0
        %v965 = vadd.f32 %v797, %v964
        %v966 = vpop.f32.mrb[0].mxu0
        %967 = vmatprep.mubr.bf16.mxu0 0
        %968 = vmatmul.mubr.bf16.gmra.mrb[0].mxu0 %v772
        %v969 = vpop.f32.mrb[0].mxu0
        %v970 = vadd.f32 %v797, %v969
        %v971 = vpop.f32.mrb[0].mxu0
        %v972 = vpop.f32.mrb[0].mxu0
        %v973 = vadd.f32 %v797, %v972
        %v974 = vpop.f32.mrb[0].mxu0
        %975 = vmatprep.mubr.bf16.mxu0 0
        %976 = vmatmul.mubr.bf16.gmra.mrb[0].mxu0 %v773
        %v977 = vpop.f32.mrb[0].mxu0
        %v978 = vadd.f32 %v797, %v977
        %v979 = vpop.f32.mrb[0].mxu0
        %v980 = vpop.f32.mrb[0].mxu0
        %v981 = vpop.f32.mrb[0].mxu0
        %982 = vdwg.mxu0
        %v983 = vmul.f32 %v882, 0.5
        %v984 = vmul.f32 %v885, 0.5
        %v985 = vmul.f32 %v890, 0.5
        %v986 = vmul.f32 %v893, 0.5
        %v987 = vmul.f32 %v898, 0.5
        %v988 = vmul.f32 %v901, 0.5
        %v989 = vmul.f32 %v906, 0.5
        %v990 = vmul.f32 %v909, 0.5
        %v991 = vmul.f32 %v914, 0.5
        %v992 = vmul.f32 %v917, 0.5
        %v993 = vmul.f32 %v922, 0.5
        %v994 = vmul.f32 %v925, 0.5
        %v995 = vmul.f32 %v930, 0.5
        %v996 = vmul.f32 %v933, 0.5
        %v997 = vmul.f32 %v938, 0.5
        %v998 = vmul.f32 %v941, 0.5
        %v999 = vmul.f32 %v946, 0.5
        %v1000 = vmul.f32 %v949, 0.5
        %v1001 = vmul.f32 %v954, 0.5
        %v1002 = vmul.f32 %v957, 0.5
        %v1003 = vmul.f32 %v962, 0.5
        %v1004 = vmul.f32 %v965, 0.5
        %v1005 = vmul.f32 %v970, 0.5
        %v1006 = vmul.f32 %v973, 0.5
        %v1007 = vmul.f32 %v978, 0.5
        %v1008 = vtanh.pop %v983
        %v1009 = vtanh.pop %v984
        %v1010 = vtanh.pop %v985
        %v1011 = vtanh.pop %v986
        %v1012 = vtanh.pop %v987
        %v1013 = vtanh.pop %v988
        %v1014 = vtanh.pop %v989
        %v1015 = vtanh.pop %v990
        %v1016 = vtanh.pop %v991
        %v1017 = vtanh.pop %v992
        %v1018 = vtanh.pop %v993
        %v1019 = vtanh.pop %v994
        %v1020 = vtanh.pop %v995
        %v1021 = vtanh.pop %v996
        %v1022 = vtanh.pop %v997
        %v1023 = vtanh.pop %v998
        %v1024 = vtanh.pop %v999
        %v1025 = vtanh.pop %v1000
        %v1026 = vtanh.pop %v1001
        %v1027 = vtanh.pop %v1002
        %v1028 = vtanh.pop %v1003
        %v1029 = vtanh.pop %v1004
        %v1030 = vtanh.pop %v1005
        %v1031 = vtanh.pop %v1006
        %v1032 = vtanh.pop %v1007
        %v1033 = vadd.f32 %v1008, 1.0
        %v1034 = vadd.f32 %v1009, 1.0
        %v1035 = vadd.f32 %v1010, 1.0
        %v1036 = vadd.f32 %v1011, 1.0
        %v1037 = vadd.f32 %v1012, 1.0
        %v1038 = vadd.f32 %v1013, 1.0
        %v1039 = vadd.f32 %v1014, 1.0
        %v1040 = vadd.f32 %v1015, 1.0
        %v1041 = vadd.f32 %v1016, 1.0
        %v1042 = vadd.f32 %v1017, 1.0
        %v1043 = vadd.f32 %v1018, 1.0
        %v1044 = vadd.f32 %v1019, 1.0
        %v1045 = vadd.f32 %v1020, 1.0
        %v1046 = vadd.f32 %v1021, 1.0
        %v1047 = vadd.f32 %v1022, 1.0
        %v1048 = vadd.f32 %v1023, 1.0
        %v1049 = vadd.f32 %v1024, 1.0
        %v1050 = vadd.f32 %v1025, 1.0
        %v1051 = vadd.f32 %v1026, 1.0
        %v1052 = vadd.f32 %v1027, 1.0
        %v1053 = vadd.f32 %v1028, 1.0
        %v1054 = vadd.f32 %v1029, 1.0
        %v1055 = vadd.f32 %v1030, 1.0
        %v1056 = vadd.f32 %v1031, 1.0
        %v1057 = vadd.f32 %v1032, 1.0
        %v1058 = vmul.f32 %v983, %v1033
        %v1059 = vmul.f32 %v984, %v1034
        %v1060 = vmul.f32 %v985, %v1035
        %v1061 = vmul.f32 %v986, %v1036
        %v1062 = vmul.f32 %v987, %v1037
        %v1063 = vmul.f32 %v988, %v1038
        %v1064 = vmul.f32 %v989, %v1039
        %v1065 = vmul.f32 %v990, %v1040
        %v1066 = vmul.f32 %v991, %v1041
        %v1067 = vmul.f32 %v992, %v1042
        %v1068 = vmul.f32 %v993, %v1043
        %v1069 = vmul.f32 %v994, %v1044
        %v1070 = vmul.f32 %v995, %v1045
        %v1071 = vmul.f32 %v996, %v1046
        %v1072 = vmul.f32 %v997, %v1047
        %v1073 = vmul.f32 %v998, %v1048
        %v1074 = vmul.f32 %v999, %v1049
        %v1075 = vmul.f32 %v1000, %v1050
        %v1076 = vmul.f32 %v1001, %v1051
        %v1077 = vmul.f32 %v1002, %v1052
        %v1078 = vmul.f32 %v1003, %v1053
        %v1079 = vmul.f32 %v1004, %v1054
        %v1080 = vmul.f32 %v1005, %v1055
        %v1081 = vmul.f32 %v1006, %v1056
        %v1082 = vmul.f32 %v1007, %v1057
        %v1083 = vpack.c.bf16 %v1059, %v1058
        %v1084 = vpack.c.bf16 %v1061, %v1060
        %v1085 = vpack.c.bf16 %v1063, %v1062
        %v1086 = vpack.c.bf16 %v1065, %v1064
        %v1087 = vpack.c.bf16 %v1067, %v1066
        %v1088 = vpack.c.bf16 %v1069, %v1068
        %v1089 = vpack.c.bf16 %v1071, %v1070
        %v1090 = vpack.c.bf16 %v1073, %v1072
        %v1091 = vpack.c.bf16 %v1075, %v1074
        %v1092 = vpack.c.bf16 %v1077, %v1076
        %v1093 = vpack.c.bf16 %v1079, %v1078
        %v1094 = vpack.c.bf16 %v1081, %v1080
        %v1095 = vpack.c.bf16 %v1082, %v1082
        %s1096 = scalar_lea.vmem %s3, 128
        %v1097 = vld [vmem:[%s1096] sm:$0xf]
        %v1098 = vld [vmem:[%s1096 + $0x4] sm:$0xf]
        %v1099 = vld [vmem:[%s1096 + $0x8] sm:$0xf]
        %v1100 = vld [vmem:[%s1096 + $0xc] sm:$0xf]
        %v1101 = vld [vmem:[%s1096 + $0x10] sm:$0xf]
        %v1102 = vld [vmem:[%s1096 + $0x14] sm:$0xf]
        %v1103 = vld [vmem:[%s1096 + $0x18] sm:$0xf]
        %v1104 = vld [vmem:[%s1096 + $0x1c] sm:$0xf]
        %v1105 = vld [vmem:[%s1096 + $0x20] sm:$0xf]
        %v1106 = vld [vmem:[%s1096 + $0x24] sm:$0xf]
        %v1107 = vld [vmem:[%s1096 + $0x28] sm:$0xf]
        %v1108 = vld [vmem:[%s1096 + $0x2c] sm:$0xf]
        %v1109 = vld [vmem:[%s1096 + $0x30] sm:$0xf]
        %v1110 = vld [vmem:[%s1096 + $0x34] sm:$0xf]
        %v1111 = vld [vmem:[%s1096 + $0x38] sm:$0xf]
        %v1112 = vld [vmem:[%s1096 + $0x3c] sm:$0xf]
        %s1113 = scalar_lea.vmem %s4, 2
        %v1114 = vld [vmem:[%s1113] sm:$0x1]
        %v1116 = vlaneseq
        %v1117 = vshrl.u32 %v1116, 7
        %v1118 = vsub.s32 0, %v1117
        %v1119 = vrot.slane %v1114, %v1118
        %v1137 = vunpack.c.l.b16 %v1097
        %v1138 = vunpack.c.l.b16 %v1098
        %v1139 = vunpack.c.l.b16 %v1099
        %v1140 = vunpack.c.l.b16 %v1100
        %v1141 = vunpack.c.l.b16 %v1101
        %v1142 = vunpack.c.l.b16 %v1102
        %v1143 = vunpack.c.l.b16 %v1103
        %v1144 = vunpack.c.l.b16 %v1104
        %v1145 = vunpack.c.l.b16 %v1105
        %v1146 = vunpack.c.l.b16 %v1106
        %v1147 = vunpack.c.l.b16 %v1107
        %v1148 = vunpack.c.l.b16 %v1108
        %v1149 = vunpack.c.l.b16 %v1109
        %v1150 = vunpack.c.l.b16 %v1110
        %v1151 = vunpack.c.l.b16 %v1111
        %v1152 = vunpack.c.l.b16 %v1112
        %v1153 = vpack.c.b16 %v1138, %v1137
        %v1154 = vpack.c.b16 %v1140, %v1139
        %v1155 = vpack.c.b16 %v1142, %v1141
        %v1156 = vpack.c.b16 %v1144, %v1143
        %v1157 = vpack.c.b16 %v1146, %v1145
        %v1158 = vpack.c.b16 %v1148, %v1147
        %v1159 = vpack.c.b16 %v1150, %v1149
        %v1160 = vpack.c.b16 %v1152, %v1151
        %1169 = vmatprep.subr.bf16.mxu0 0
        %1170 = vmatpush1.bf16.msra.mxu0 %v1153
        %1171 = vmatprep.subr.bf16.mxu0 0
        %1172 = vmatpush1.bf16.msra.mxu0 %v1154
        %1173 = vmatprep.subr.bf16.mxu0 0
        %1174 = vmatpush1.bf16.msra.mxu0 %v1155
        %1175 = vmatprep.subr.bf16.mxu0 0
        %1176 = vmatpush1.bf16.msra.mxu0 %v1156
        %1177 = vmatprep.subr.bf16.mxu0 0
        %1178 = vmatpush1.bf16.msra.mxu0 %v1157
        %1179 = vmatprep.subr.bf16.mxu0 0
        %1180 = vmatpush1.bf16.msra.mxu0 %v1158
        %1181 = vmatprep.subr.bf16.mxu0 0
        %1182 = vmatpush1.bf16.msra.mxu0 %v1159
        %1183 = vmatprep.subr.bf16.mxu0 0
        %1184 = vmatpush1.bf16.msra.mxu0 %v1160
        %1185 = vmatprep.subr.bf16.mxu0 0
        %1186 = vmatpush1.bf16.msra.mxu0 0
        %1187 = vmatprep.subr.bf16.mxu0 0
        %1188 = vmatpush1.bf16.msra.mxu0 0
        %1189 = vmatprep.subr.bf16.mxu0 0
        %1190 = vmatpush1.bf16.msra.mxu0 0
        %1191 = vmatprep.subr.bf16.mxu0 0
        %1192 = vmatpush1.bf16.msra.mxu0 0
        %1193 = vmatprep.subr.bf16.mxu0 0
        %1194 = vmatpush1.bf16.msra.mxu0 0
        %1195 = vmatprep.subr.bf16.mxu0 0
        %1196 = vmatpush1.bf16.msra.mxu0 0
        %1197 = vmatprep.subr.bf16.mxu0 0
        %1198 = vmatpush1.bf16.msra.mxu0 0
        %1199 = vmatprep.subr.bf16.mxu0 0
        %1200 = vmatpush1.bf16.msra.mxu0 0
        %1201 = vmatprep.mubr.bf16.mxu0 0
        %1202 = vmatmul.mubr.bf16.gmra.mrb[0].mxu0 %v1083
        %v1203 = vpop.f32.mrb[0].mxu0
        %v1204 = vadd.f32 %v1119, %v1203
        %v1205 = vpop.f32.mrb[0].mxu0
        %v1206 = vpop.f32.mrb[0].mxu0
        %v1207 = vadd.f32 %v1119, %v1206
        %v1208 = vpop.f32.mrb[0].mxu0
        %1209 = vmatprep.mubr.bf16.mxu0 0
        %1210 = vmatmul.mubr.bf16.gmra.mrb[0].mxu0 %v1084
        %v1211 = vpop.f32.mrb[0].mxu0
        %v1212 = vadd.f32 %v1119, %v1211
        %v1213 = vpop.f32.mrb[0].mxu0
        %v1214 = vpop.f32.mrb[0].mxu0
        %v1215 = vadd.f32 %v1119, %v1214
        %v1216 = vpop.f32.mrb[0].mxu0
        %1217 = vmatprep.mubr.bf16.mxu0 0
        %1218 = vmatmul.mubr.bf16.gmra.mrb[0].mxu0 %v1085
        %v1219 = vpop.f32.mrb[0].mxu0
        %v1220 = vadd.f32 %v1119, %v1219
        %v1221 = vpop.f32.mrb[0].mxu0
        %v1222 = vpop.f32.mrb[0].mxu0
        %v1223 = vadd.f32 %v1119, %v1222
        %v1224 = vpop.f32.mrb[0].mxu0
        %1225 = vmatprep.mubr.bf16.mxu0 0
        %1226 = vmatmul.mubr.bf16.gmra.mrb[0].mxu0 %v1086
        %v1227 = vpop.f32.mrb[0].mxu0
        %v1228 = vadd.f32 %v1119, %v1227
        %v1229 = vpop.f32.mrb[0].mxu0
        %v1230 = vpop.f32.mrb[0].mxu0
        %v1231 = vadd.f32 %v1119, %v1230
        %v1232 = vpop.f32.mrb[0].mxu0
        %1233 = vmatprep.mubr.bf16.mxu0 0
        %1234 = vmatmul.mubr.bf16.gmra.mrb[0].mxu0 %v1087
        %v1235 = vpop.f32.mrb[0].mxu0
        %v1236 = vadd.f32 %v1119, %v1235
        %v1237 = vpop.f32.mrb[0].mxu0
        %v1238 = vpop.f32.mrb[0].mxu0
        %v1239 = vadd.f32 %v1119, %v1238
        %v1240 = vpop.f32.mrb[0].mxu0
        %1241 = vmatprep.mubr.bf16.mxu0 0
        %1242 = vmatmul.mubr.bf16.gmra.mrb[0].mxu0 %v1088
        %v1243 = vpop.f32.mrb[0].mxu0
        %v1244 = vadd.f32 %v1119, %v1243
        %v1245 = vpop.f32.mrb[0].mxu0
        %v1246 = vpop.f32.mrb[0].mxu0
        %v1247 = vadd.f32 %v1119, %v1246
        %v1248 = vpop.f32.mrb[0].mxu0
        %1249 = vmatprep.mubr.bf16.mxu0 0
        %1250 = vmatmul.mubr.bf16.gmra.mrb[0].mxu0 %v1089
        %v1251 = vpop.f32.mrb[0].mxu0
        %v1252 = vadd.f32 %v1119, %v1251
        %v1253 = vpop.f32.mrb[0].mxu0
        %v1254 = vpop.f32.mrb[0].mxu0
        %v1255 = vadd.f32 %v1119, %v1254
        %v1256 = vpop.f32.mrb[0].mxu0
        %1257 = vmatprep.mubr.bf16.mxu0 0
        %1258 = vmatmul.mubr.bf16.gmra.mrb[0].mxu0 %v1090
        %v1259 = vpop.f32.mrb[0].mxu0
        %v1260 = vadd.f32 %v1119, %v1259
        %v1261 = vpop.f32.mrb[0].mxu0
        %v1262 = vpop.f32.mrb[0].mxu0
        %v1263 = vadd.f32 %v1119, %v1262
        %v1264 = vpop.f32.mrb[0].mxu0
        %1265 = vmatprep.mubr.bf16.mxu0 0
        %1266 = vmatmul.mubr.bf16.gmra.mrb[0].mxu0 %v1091
        %v1267 = vpop.f32.mrb[0].mxu0
        %v1268 = vadd.f32 %v1119, %v1267
        %v1269 = vpop.f32.mrb[0].mxu0
        %v1270 = vpop.f32.mrb[0].mxu0
        %v1271 = vadd.f32 %v1119, %v1270
        %v1272 = vpop.f32.mrb[0].mxu0
        %1273 = vmatprep.mubr.bf16.mxu0 0
        %1274 = vmatmul.mubr.bf16.gmra.mrb[0].mxu0 %v1092
        %v1275 = vpop.f32.mrb[0].mxu0
        %v1276 = vadd.f32 %v1119, %v1275
        %v1277 = vpop.f32.mrb[0].mxu0
        %v1278 = vpop.f32.mrb[0].mxu0
        %v1279 = vadd.f32 %v1119, %v1278
        %v1280 = vpop.f32.mrb[0].mxu0
        %1281 = vmatprep.mubr.bf16.mxu0 0
        %1282 = vmatmul.mubr.bf16.gmra.mrb[0].mxu0 %v1093
        %v1283 = vpop.f32.mrb[0].mxu0
        %v1284 = vadd.f32 %v1119, %v1283
        %v1285 = vpop.f32.mrb[0].mxu0
        %v1286 = vpop.f32.mrb[0].mxu0
        %v1287 = vadd.f32 %v1119, %v1286
        %v1288 = vpop.f32.mrb[0].mxu0
        %1289 = vmatprep.mubr.bf16.mxu0 0
        %1290 = vmatmul.mubr.bf16.gmra.mrb[0].mxu0 %v1094
        %v1291 = vpop.f32.mrb[0].mxu0
        %v1292 = vadd.f32 %v1119, %v1291
        %v1293 = vpop.f32.mrb[0].mxu0
        %v1294 = vpop.f32.mrb[0].mxu0
        %v1295 = vadd.f32 %v1119, %v1294
        %v1296 = vpop.f32.mrb[0].mxu0
        %1297 = vmatprep.mubr.bf16.mxu0 0
        %1298 = vmatmul.mubr.bf16.gmra.mrb[0].mxu0 %v1095
        %v1299 = vpop.f32.mrb[0].mxu0
        %v1300 = vadd.f32 %v1119, %v1299
        %v1301 = vpop.f32.mrb[0].mxu0
        %v1302 = vpop.f32.mrb[0].mxu0
        %v1303 = vpop.f32.mrb[0].mxu0
        %1304 = vdwg.mxu0
        %v1305 = vmul.f32 %v1204, 0.5
        %v1306 = vmul.f32 %v1207, 0.5
        %v1307 = vmul.f32 %v1212, 0.5
        %v1308 = vmul.f32 %v1215, 0.5
        %v1309 = vmul.f32 %v1220, 0.5
        %v1310 = vmul.f32 %v1223, 0.5
        %v1311 = vmul.f32 %v1228, 0.5
        %v1312 = vmul.f32 %v1231, 0.5
        %v1313 = vmul.f32 %v1236, 0.5
        %v1314 = vmul.f32 %v1239, 0.5
        %v1315 = vmul.f32 %v1244, 0.5
        %v1316 = vmul.f32 %v1247, 0.5
        %v1317 = vmul.f32 %v1252, 0.5
        %v1318 = vmul.f32 %v1255, 0.5
        %v1319 = vmul.f32 %v1260, 0.5
        %v1320 = vmul.f32 %v1263, 0.5
        %v1321 = vmul.f32 %v1268, 0.5
        %v1322 = vmul.f32 %v1271, 0.5
        %v1323 = vmul.f32 %v1276, 0.5
        %v1324 = vmul.f32 %v1279, 0.5
        %v1325 = vmul.f32 %v1284, 0.5
        %v1326 = vmul.f32 %v1287, 0.5
        %v1327 = vmul.f32 %v1292, 0.5
        %v1328 = vmul.f32 %v1295, 0.5
        %v1329 = vmul.f32 %v1300, 0.5
        %v1330 = vtanh.pop %v1305
        %v1331 = vtanh.pop %v1306
        %v1332 = vtanh.pop %v1307
        %v1333 = vtanh.pop %v1308
        %v1334 = vtanh.pop %v1309
        %v1335 = vtanh.pop %v1310
        %v1336 = vtanh.pop %v1311
        %v1337 = vtanh.pop %v1312
        %v1338 = vtanh.pop %v1313
        %v1339 = vtanh.pop %v1314
        %v1340 = vtanh.pop %v1315
        %v1341 = vtanh.pop %v1316
        %v1342 = vtanh.pop %v1317
        %v1343 = vtanh.pop %v1318
        %v1344 = vtanh.pop %v1319
        %v1345 = vtanh.pop %v1320
        %v1346 = vtanh.pop %v1321
        %v1347 = vtanh.pop %v1322
        %v1348 = vtanh.pop %v1323
        %v1349 = vtanh.pop %v1324
        %v1350 = vtanh.pop %v1325
        %v1351 = vtanh.pop %v1326
        %v1352 = vtanh.pop %v1327
        %v1353 = vtanh.pop %v1328
        %v1354 = vtanh.pop %v1329
        %v1355 = vadd.f32 %v1330, 1.0
        %v1356 = vadd.f32 %v1331, 1.0
        %v1357 = vadd.f32 %v1332, 1.0
        %v1358 = vadd.f32 %v1333, 1.0
        %v1359 = vadd.f32 %v1334, 1.0
        %v1360 = vadd.f32 %v1335, 1.0
        %v1361 = vadd.f32 %v1336, 1.0
        %v1362 = vadd.f32 %v1337, 1.0
        %v1363 = vadd.f32 %v1338, 1.0
        %v1364 = vadd.f32 %v1339, 1.0
        %v1365 = vadd.f32 %v1340, 1.0
        %v1366 = vadd.f32 %v1341, 1.0
        %v1367 = vadd.f32 %v1342, 1.0
        %v1368 = vadd.f32 %v1343, 1.0
        %v1369 = vadd.f32 %v1344, 1.0
        %v1370 = vadd.f32 %v1345, 1.0
        %v1371 = vadd.f32 %v1346, 1.0
        %v1372 = vadd.f32 %v1347, 1.0
        %v1373 = vadd.f32 %v1348, 1.0
        %v1374 = vadd.f32 %v1349, 1.0
        %v1375 = vadd.f32 %v1350, 1.0
        %v1376 = vadd.f32 %v1351, 1.0
        %v1377 = vadd.f32 %v1352, 1.0
        %v1378 = vadd.f32 %v1353, 1.0
        %v1379 = vadd.f32 %v1354, 1.0
        %v1380 = vmul.f32 %v1305, %v1355
        %v1381 = vmul.f32 %v1306, %v1356
        %v1382 = vmul.f32 %v1307, %v1357
        %v1383 = vmul.f32 %v1308, %v1358
        %v1384 = vmul.f32 %v1309, %v1359
        %v1385 = vmul.f32 %v1310, %v1360
        %v1386 = vmul.f32 %v1311, %v1361
        %v1387 = vmul.f32 %v1312, %v1362
        %v1388 = vmul.f32 %v1313, %v1363
        %v1389 = vmul.f32 %v1314, %v1364
        %v1390 = vmul.f32 %v1315, %v1365
        %v1391 = vmul.f32 %v1316, %v1366
        %v1392 = vmul.f32 %v1317, %v1367
        %v1393 = vmul.f32 %v1318, %v1368
        %v1394 = vmul.f32 %v1319, %v1369
        %v1395 = vmul.f32 %v1320, %v1370
        %v1396 = vmul.f32 %v1321, %v1371
        %v1397 = vmul.f32 %v1322, %v1372
        %v1398 = vmul.f32 %v1323, %v1373
        %v1399 = vmul.f32 %v1324, %v1374
        %v1400 = vmul.f32 %v1325, %v1375
        %v1401 = vmul.f32 %v1326, %v1376
        %v1402 = vmul.f32 %v1327, %v1377
        %v1403 = vmul.f32 %v1328, %v1378
        %v1404 = vmul.f32 %v1329, %v1379
        %1405 = vst [vmem:[%s218] sm:$0xff] %v1380
        %1406 = vst [vmem:[%s218 + $0x8] sm:$0xff] %v1381
        %1407 = vst [vmem:[%s218 + $0x10] sm:$0xff] %v1382
        %1408 = vst [vmem:[%s218 + $0x18] sm:$0xff] %v1383
        %1409 = vst [vmem:[%s218 + $0x20] sm:$0xff] %v1384
        %1410 = vst [vmem:[%s218 + $0x28] sm:$0xff] %v1385
        %1411 = vst [vmem:[%s218 + $0x30] sm:$0xff] %v1386
        %1412 = vst [vmem:[%s218 + $0x38] sm:$0xff] %v1387
        %1413 = vst [vmem:[%s218 + $0x40] sm:$0xff] %v1388
        %1414 = vst [vmem:[%s218 + $0x48] sm:$0xff] %v1389
        %1415 = vst [vmem:[%s218 + $0x50] sm:$0xff] %v1390
        %1416 = vst [vmem:[%s218 + $0x58] sm:$0xff] %v1391
        %1417 = vst [vmem:[%s218 + $0x60] sm:$0xff] %v1392
        %1418 = vst [vmem:[%s218 + $0x68] sm:$0xff] %v1393
        %1419 = vst [vmem:[%s218 + $0x70] sm:$0xff] %v1394
        %1420 = vst [vmem:[%s218 + $0x78] sm:$0xff] %v1395
        %1421 = vst [vmem:[%s218 + $0x80] sm:$0xff] %v1396
        %1422 = vst [vmem:[%s218 + $0x88] sm:$0xff] %v1397
        %1423 = vst [vmem:[%s218 + $0x90] sm:$0xff] %v1398
        %1424 = vst [vmem:[%s218 + $0x98] sm:$0xff] %v1399
        %1425 = vst [vmem:[%s218 + $0xa0] sm:$0xff] %v1400
        %1426 = vst [vmem:[%s218 + $0xa8] sm:$0xff] %v1401
        %1427 = vst [vmem:[%s218 + $0xb0] sm:$0xff] %v1402
        %1428 = vst [vmem:[%s218 + $0xb8] sm:$0xff] %v1403
        %1429 = vst [vmem:[%s218 + $0xc0] sm:$0xff] %v1404
        %s1430 = sand.u32 %s137, 1
        %s1431 = scalar_lea.sflag [#allocation3], %s1430
        %s1432 = sand.u32 %s137, 1
        %s1433 = smul.addr %s1432, 200
        %s1434 = scalar_lea.vmem [#allocation2], %s1433
        // Predicated region
        $region41: #{tpu_custom_call.1} parent=39 // pred_check
          %p1435 = pneg %p147
        $region42: #{tpu_custom_call.1} parent=39 // pred_check_branch
          %1437 = sbr.rel (%p1435) target = $region44
        $region43: #{tpu_custom_call.1} parent=39 // pred_region
          %s1438 = smul.u32 25, %s19
          %s1440 = ssub.s32 3200, 3200
          %1441 = vsyncadd %s1431, %s1440
          %s1442 = smul.addr %s1438, 128
          %s1443 = scalar_lea.hbm %s5, %s1442
          %s1444 = sshll.u32 %s1434, 4
          %s1445 = int_to_ptr.vmem [resolvable:$true] %s1444
          %1450 = dma.vmem_to_hbm [thread:$0]  %s1445, 3200, %s1443, %s1431, 128, 128, 8
        $region44: #{tpu_custom_call.1} parent=39 // pred_fallthru
          _
      $region40: #{tpu_custom_call.1} parent=5 // pred_fallthru
        _
      %p1451 = scmp.le.s32.totalorder 2, %s14
      // Predicated region
      $region45: #{tpu_custom_call.1} parent=5 // pred_check
        %p1452 = pneg %p1451
      $region46: #{tpu_custom_call.1} parent=5 // pred_check_branch
        %1454 = sbr.rel (%p1452) target = $region48
      $region47: #{tpu_custom_call.1} parent=5 // pred_region
        %s1455 = ssub.s32 %s14, 2
        // Predicated region
        $region49: #{tpu_custom_call.1} parent=47 // pred_check
          %p1456 = pneg %p153
        $region50: #{tpu_custom_call.1} parent=47 // pred_check_branch
          %1458 = sbr.rel (%p1456) target = $region52
        $region51: #{tpu_custom_call.1} parent=47 // pred_region
          %s1459 = sand.u32 %s138, 1
          %s1460 = scalar_lea.sflag [#allocation3], %s1459
          %s1461 = sand.u32 %s138, 1
          %s1462 = smul.addr %s1461, 200
          %s1463 = scalar_lea.vmem [#allocation2], %s1462
          %1464 = dma.done %s1460, 3200
        $region52: #{tpu_custom_call.1} parent=47 // pred_fallthru
          _
      $region48: #{tpu_custom_call.1} parent=5 // pred_fallthru
        _
    $region6: #{tpu_custom_call.1} parent=1 // loop_footer
      %s18 = sadd.s32 1, %s14
    $region7: #{tpu_custom_call.1} parent=1 // loop_footer_branch
      %13 = sbr.rel target = $region3
    $region8: #{tpu_custom_call.1} parent=1 // loop_exit
      _
    %1465 = vsyncpa [#allocation3], 1
    %s1466 = scalar_lea.sflag [#allocation3], 1
    %1467 = vsyncpa %s1466, 1

</llo_original>
